<compile_context>
chip_gen: v7x
topology: tpu7x:2x2x1
jax: 0.10.0
libtpu: 0.0.40
codegen_flags: <defaults>
</compile_context>

<pallas_src>
import functools

import jax
import jax.numpy as jnp
from jax.experimental import pallas as pl
from jax.experimental.pallas import tpu as pltpu


def build_pe_table(embed: int, pad_size: int) -> jnp.ndarray:
    """pe[pos, i] = pos / 10000 ** ((i // 2) * 2 / embed); sin on even i, cos on odd i."""
    pos = jnp.arange(pad_size, dtype=jnp.float32)[:, None]           # [S, 1]
    i = jnp.arange(embed, dtype=jnp.float32)[None, :]                # [1, E]
    exponent = (jnp.floor(i / 2.0) * 2.0) / float(embed)
    angle = pos / jnp.power(10000.0, exponent)                       # [S, E]
    even = (jnp.arange(embed) % 2 == 0)[None, :]
    return jnp.where(even, jnp.sin(angle), jnp.cos(angle)).astype(jnp.float32)


# --------------------------- kernels ---------------------------------------


def _pe_add_kernel(x_ref, pe_ref, o_ref):
    # x_ref: (tB, F); pe_ref: (1, F) -> broadcasts over the row axis.
    out = x_ref[...].astype(jnp.float32) + pe_ref[...].astype(jnp.float32)
    o_ref[...] = out.astype(o_ref.dtype)


def _pe_add_dropout_kernel(x_ref, pe_ref, bits_ref, o_ref, *, threshold: int,
                           scale: float):
    out = x_ref[...].astype(jnp.float32) + pe_ref[...].astype(jnp.float32)
    # Inverted dropout via integer threshold: keep with prob (1 - p).
    keep = bits_ref[...] >= jnp.uint32(threshold)
    o_ref[...] = jnp.where(keep, out * jnp.float32(scale),
                           jnp.float32(0.0)).astype(o_ref.dtype)


# --------------------------- wrapper ----------------------------------------


def _pick_batch_tile(num_rows: int, row_bytes: int,
                     target_bytes: int = 2 * 1024 * 1024) -> int:
    """Largest row-tile that (a) targets ~2 MiB per block and (b) satisfies the
    (8,128) block constraint: tile == num_rows, or tile % 8 == 0 dividing it."""
    rows = max(1, target_bytes // max(1, row_bytes))
    if rows >= num_rows:
        return num_rows
    t = (min(rows, num_rows) // 8) * 8
    while t >= 8:
        if num_rows % t == 0:
            return t
        t -= 8
    return num_rows


def positional_encoding(x: jnp.ndarray, pe: jnp.ndarray, *,
                        dropout_p: float = 0.0, training: bool = False,
                        rng_key=None) -> jnp.ndarray:
    """x: [B, S, E]; pe: [S, E] -> dropout(x + pe), same shape/dtype as x."""
    B, S, E = x.shape
    assert pe.shape == (S, E)
    apply_dropout = bool(training) and float(dropout_p) > 0.0
    if apply_dropout:
        assert dropout_p < 1.0
        if rng_key is None:
            rng_key = jax.random.PRNGKey(0)

    F = S * E
    itemsize = jnp.dtype(x.dtype).itemsize

    # Lane-dense 2-D views (pure layout plumbing; op is elementwise).
    x2 = x.reshape(B, F)
    pe2 = pe.reshape(1, F)

    tB = _pick_batch_tile(B, F * itemsize)
    grid = (B // tB,)

    x_spec = pl.BlockSpec((tB, F), lambda b: (b, 0))
    pe_spec = pl.BlockSpec((1, F), lambda b: (0, 0))     # constant -> fetched once
    out_spec = pl.BlockSpec((tB, F), lambda b: (b, 0))

    # VMEM budget: double-buffered x + out (+ bits), pe resident once (x2 buf).
    resident = 2 * tB * F * itemsize            # x
    resident += 2 * tB * F * itemsize           # out
    resident += 2 * F * 4                       # pe
    if apply_dropout:
        resident += 2 * tB * F * 4              # uint32 bits
    # Explicit limit, capped for v7x's 64 MiB physical VMEM.
    vmem_limit = int(min(64 * 1024 * 1024, max(32 * 1024 * 1024, 2 * resident)))

    io_bytes = (B * F + F) * itemsize + B * F * itemsize   # reads + writes
    flops = B * F                                           # the add

    if apply_dropout:
        bits = jax.random.bits(rng_key, (B, F), dtype=jnp.uint32)
        threshold = min(int(round(float(dropout_p) * 4294967296.0)),
                        4294967295)
        scale = 1.0 / (1.0 - float(dropout_p))
        kernel = functools.partial(_pe_add_dropout_kernel, threshold=threshold,
                                   scale=scale)
        in_specs = [x_spec, pe_spec, pl.BlockSpec((tB, F), lambda b: (b, 0))]
        operands = (x2, pe2, bits)
        io_bytes += B * F * 4
        flops += 2 * B * F
    else:
        kernel = _pe_add_kernel
        in_specs = [x_spec, pe_spec]
        operands = (x2, pe2)

    out2 = pl.pallas_call(
        kernel,
        out_shape=jax.ShapeDtypeStruct((B, F), x.dtype),
        grid=grid,
        in_specs=in_specs,
        out_specs=out_spec,
        compiler_params=pltpu.CompilerParams(
            dimension_semantics=("parallel",),
            vmem_limit_bytes=vmem_limit),
        cost_estimate=pl.CostEstimate(flops=int(flops), transcendentals=0,
                                      bytes_accessed=int(io_bytes)),
    )(*operands)

    return out2.reshape(B, S, E)


# --------------------------- demo / self-test --------------------------------

if __name__ == "__main__":
    # Small shapes consistent with the module: batch=2, pad_size=8, embed=32.
    B, S, E = 2, 8, 32
    dropout_p = 0.1

    key = jax.random.PRNGKey(0)
    kx, kdrop = jax.random.split(key)
    x = jax.random.normal(kx, (B, S, E), dtype=jnp.float32)
    pe = build_pe_table(embed=E, pad_size=S)

    ref = x + pe[None, :, :]

    # Eval mode (dropout is identity): must match x + pe.
    out_eval = positional_encoding(x, pe, dropout_p=dropout_p, training=False)
    out_eval = jax.block_until_ready(out_eval)
    assert out_eval.shape == (B, S, E)
    assert jnp.allclose(out_eval, ref, atol=1e-5, rtol=1e-5)

    # Training mode: in-kernel dropout (deterministic per rng_key).
    out_train = positional_encoding(x, pe, dropout_p=dropout_p, training=True,
                                    rng_key=kdrop)
    out_train = jax.block_until_ready(out_train)
    assert out_train.shape == (B, S, E)
    # Kept elements equal (x + pe) / (1 - p); dropped elements are exactly 0.
    scaled_ref = ref / (1.0 - dropout_p)
    ok = jnp.logical_or(jnp.isclose(out_train, scaled_ref, atol=1e-5),
                        out_train == 0.0)
    assert bool(jnp.all(ok))

    print("KERNEL_OK")
</pallas_src>

<mosaic_0001>
module attributes {stable_mosaic.version = 11 : i64} {
  func.func @_pe_add_kernel(%arg0: i32, %arg1: memref<2x256xf32, #tpu.memory_space<vmem>>, %arg2: memref<1x256xf32, #tpu.memory_space<vmem>>, %arg3: memref<2x256xf32, #tpu.memory_space<vmem>>) attributes {dimension_semantics = [#tpu.dimension_semantics<parallel>], iteration_bounds = array<i64: 1>, scalar_prefetch = 0 : i64, scratch_operands = 0 : i64, tpu.core_type = #tpu.core_type<tc>, window_params = [{transform_indices = @transform_0, window_bounds = array<i64: 2, 256>}, {pipeline_mode = #tpu.pipeline_mode<synchronous>, transform_indices = @transform_1, window_bounds = array<i64: 1, 256>}, {transform_indices = @transform_2, window_bounds = array<i64: 2, 256>}]} {
    %c0 = arith.constant 0 : index
    %c0_0 = arith.constant 0 : index
    %0 = vector.load %arg1[%c0, %c0_0] : memref<2x256xf32, #tpu.memory_space<vmem>>, vector<2x256xf32>
    %c0_1 = arith.constant 0 : index
    %c0_2 = arith.constant 0 : index
    %1 = vector.load %arg2[%c0_1, %c0_2] : memref<1x256xf32, #tpu.memory_space<vmem>>, vector<1x256xf32>
    %2 = vector.broadcast %1 : vector<1x256xf32> to vector<2x256xf32>
    %3 = arith.addf %0, %2 : vector<2x256xf32>
    %c0_3 = arith.constant 0 : index
    %c0_4 = arith.constant 0 : index
    %4 = vector.load %arg3[%c0_3, %c0_4] : memref<2x256xf32, #tpu.memory_space<vmem>>, vector<2x256xf32>
    tpu.vector_store %arg3[%c0_3, %c0_4], %3 {strides = array<i32>} : memref<2x256xf32, #tpu.memory_space<vmem>>, vector<2x256xf32>,
    return
  }
  func.func @transform_0(%arg0: i32) -> (i32, i32) {
    %c0_i32 = arith.constant 0 : i32
    %c0_i32_0 = arith.constant 0 : i32
    return %arg0, %c0_i32 : i32, i32
  }
  func.func @transform_1(%arg0: i32) -> (i32, i32) {
    %c0_i32 = arith.constant 0 : i32
    %c0_i32_0 = arith.constant 0 : i32
    %c0_i32_1 = arith.constant 0 : i32
    return %c0_i32, %c0_i32_0 : i32, i32
  }
  func.func @transform_2(%arg0: i32) -> (i32, i32) {
    %c0_i32 = arith.constant 0 : i32
    %c0_i32_0 = arith.constant 0 : i32
    return %arg0, %c0_i32 : i32, i32
  }
}

</mosaic_0001>

<llo_original>
// kernel: tpu_custom_call.1
$region0: #{tpu_custom_call.1}
  #allocation0 [shape = 'u32[]', space=smem, size = 0x4, offset = 0x4, fixed_abs, tag = 'smem constant byte address 0x4 - core index']
  #allocation1 [shape = 'u32[144,128]{1,0:T(1,128)}', space=vmem, size = 0x12000, scoped, tag = 'internal scratch']
  %s0 = inlined_call_operand.hbm [shape: f32[2,256], index: 0, kind: input, shape index: {}]
  %s1 = inlined_call_operand.vmem [shape: f32[1,256], index: 1, kind: input, shape index: {}]
  %s2 = inlined_call_operand.hbm [shape: f32[2,256], index: 2, kind: output, shape index: {}]
  %s3 = sld [smem:[#allocation0]]
  $region22: #{tpu_custom_call.1} parent=0
    _
  %s5 = ssub.s32 1, %s3
  %s6 = scalar_select 0, %s5, %s3
  $region1: #{tpu_custom_call.1} parent=0
    #allocation2 [shape = 'u8[2048]{0}', space=vmem, size = 0x800, scoped, tag = 'input window, operand 0, single buffered']
    #allocation3 [shape = 's32[1]{0}', space=sflag, size = 0x4, scoped, tag = 'scoped memory for tpu_custom_call.1']
    #allocation4 [shape = 's32[1]{0}', space=sflag, size = 0x4, scoped, tag = 'scoped memory for tpu_custom_call.1']
    #allocation5 [shape = 'u8[2048]{0}', space=vmem, size = 0x800, scoped, tag = 'output window, operand 0, single buffered']
    %7 = vsyncpa [#allocation3], 0
    %8 = vsyncpa [#allocation4], 0
    // Predicated region
    $region2: #{tpu_custom_call.1} parent=1 // pred_check
      _
    $region3: #{tpu_custom_call.1} parent=1 // pred_check_branch
      %10 = sbr.rel (0) target = $region5
    $region4: #{tpu_custom_call.1} parent=1 // pred_region
      %s12 = ssub.s32 64, 64
      %13 = vsyncadd [#allocation3], %s12
      %s15 = sshll.u32 [#allocation2], 4
      %s16 = int_to_ptr.vmem [resolvable:$true] %s15
      %18 = dma.hbm_to_vmem [thread:$0]  %s0, 64, %s16, [#allocation3]
    $region5: #{tpu_custom_call.1} parent=1 // pred_fallthru
      _
    // Predicated region
    $region6: #{tpu_custom_call.1} parent=1 // pred_check
      _
    $region7: #{tpu_custom_call.1} parent=1 // pred_check_branch
      %20 = sbr.rel (0) target = $region9
    $region8: #{tpu_custom_call.1} parent=1 // pred_region
      _
    $region9: #{tpu_custom_call.1} parent=1 // pred_fallthru
      _
    // Predicated region
    $region10: #{tpu_custom_call.1} parent=1 // pred_check
      _
    $region11: #{tpu_custom_call.1} parent=1 // pred_check_branch
      %22 = sbr.rel (0) target = $region13
    $region12: #{tpu_custom_call.1} parent=1 // pred_region
      %23 = dma.done [#allocation3], 64
    $region13: #{tpu_custom_call.1} parent=1 // pred_fallthru
      _
    %v24 = vld [vmem:[#allocation2] sm:$0xf]
    %v25 = vld [vmem:[%s1] sm:$0x3]
    %v27 = vlaneseq
    %v28 = vshrl.u32 %v27, 7
    %v29 = vsub.s32 0, %v28
    %v30 = vrot.slane %v25, %v29
    %v31 = vlaneseq
    %v32 = vshrl.u32 %v31, 7
    %v33 = vsub.s32 1, %v32
    %v34 = vrot.slane %v25, %v33
    %v35 = vcombine.low %v30, %v34
    %v37 = vunpack.c.l.s4 1983009808
    %v38 = vunpack.c.0.s8 %v37
    %v39 = vlaneseq
    %v40 = vshrl.u32 %v39, 7
    %v41 = vsub.s32 %v38, %v40
    %v42 = vrot.slane %v35, %v41
    %v44 = vadd.f32 %v24, %v42
    %45 = vst [vmem:[#allocation5] sm:$0xf] %v44
    // Predicated region
    $region14: #{tpu_custom_call.1} parent=1 // pred_check
      _
    $region15: #{tpu_custom_call.1} parent=1 // pred_check_branch
      %47 = sbr.rel (0) target = $region17
    $region16: #{tpu_custom_call.1} parent=1 // pred_region
      %s49 = ssub.s32 64, 64
      %50 = vsyncadd [#allocation4], %s49
      %s52 = sshll.u32 [#allocation5], 4
      %s53 = int_to_ptr.vmem [resolvable:$true] %s52
      %55 = dma.vmem_to_hbm [thread:$0]  %s53, 64, %s2, [#allocation4]
    $region17: #{tpu_custom_call.1} parent=1 // pred_fallthru
      _
    // Predicated region
    $region18: #{tpu_custom_call.1} parent=1 // pred_check
      _
    $region19: #{tpu_custom_call.1} parent=1 // pred_check_branch
      %57 = sbr.rel (0) target = $region21
    $region20: #{tpu_custom_call.1} parent=1 // pred_region
      %58 = dma.done [#allocation4], 64
    $region21: #{tpu_custom_call.1} parent=1 // pred_fallthru
      _
    %59 = vsyncpa [#allocation3], 1
    %60 = vsyncpa [#allocation4], 1

</llo_original>
